<compile_context>
chip_gen: v6e
topology: v6e:2x2x1
jax: 0.10.0
libtpu: 0.0.40
codegen_flags: <defaults>
</compile_context>

<pallas_src>
import jax
import jax.numpy as jnp
from jax.experimental import pallas as pl
from jax.experimental.pallas import tpu as pltpu

LANE = 128     # lane width (last dim alignment)
SUBLANE = 8    # sublane width (second-to-last dim alignment)


def _round_up(n, m):
    return (n + m - 1) // m * m


def _mlp_kernel(x_ref, w1_ref, b1_ref, w2_ref, b2_ref, w3_ref, b3_ref, o_ref):
    # fc1 + ReLU: x tile arrives as f32 and is cast to bf16 here (no wrapper
    # repack pass); MXU accumulates in f32, bias/activation stay f32.
    x_b = x_ref[...].astype(jnp.bfloat16)
    h1 = jnp.dot(x_b, w1_ref[...], preferred_element_type=jnp.float32)
    h1 = jnp.maximum(h1 + b1_ref[...], 0.0)
    # fc2 + ReLU
    h2 = jnp.dot(h1.astype(jnp.bfloat16), w2_ref[...],
                 preferred_element_type=jnp.float32)
    h2 = jnp.maximum(h2 + b2_ref[...], 0.0)
    # fc3 + tanh on a lane-dense (tm, 128) tile (w3/b3 zero-padded to 128
    # output lanes).  Only column 0 is written back, keeping HBM writeback
    # at width 1.
    h3 = jnp.dot(h2.astype(jnp.bfloat16), w3_ref[...],
                 preferred_element_type=jnp.float32)
    y = jnp.tanh(h3 + b3_ref[...])
    o_ref[...] = y[:, 0:1].astype(o_ref.dtype)


def prepare_params(params):
    """One-time conversion of fp32 (in, out) params into kernel layout.

    Hoisted out of the per-call path: bf16 weight casts and fc3 lane padding
    are done once and cached, instead of on every forward call.
    """
    w1, b1 = params["w1"], params["b1"]
    w2, b2 = params["w2"], params["b2"]
    w3, b3 = params["w3"], params["b3"]
    h = w2.shape[0]
    w3_p = jnp.zeros((h, LANE), jnp.bfloat16).at[:, :1].set(
        w3.astype(jnp.bfloat16))
    b3_p = jnp.zeros((1, LANE), jnp.float32).at[:, :1].set(
        b3.astype(jnp.float32))
    return {
        "w1": w1.astype(jnp.bfloat16),
        "b1": b1.astype(jnp.float32).reshape(1, -1),
        "w2": w2.astype(jnp.bfloat16),
        "b2": b2.astype(jnp.float32).reshape(1, -1),
        "w3": w3_p,
        "b3": b3_p,
    }


def chess_value_network(x, prepared, *, tile_m=512):
    """Fused MLP forward pass.

    x: (B, input_size) float32
    prepared: output of prepare_params()
    returns: (B, 1) float32
    """
    B, K = x.shape
    w1, b1 = prepared["w1"], prepared["b1"]
    w2, b2 = prepared["w2"], prepared["b2"]
    w3, b3 = prepared["w3"], prepared["b3"]
    assert w1.shape[0] == K

    # Sublane-aligned batch tile; large default amortizes per-step overhead.
    tm = min(tile_m, _round_up(B, SUBLANE))
    # Dual-TensorCore chips (v7x) only benefit from the "parallel" batch axis
    # with >= 2 grid steps; split the tile when the batch is big enough.
    if pl.cdiv(B, tm) < 2 and B >= 2 * SUBLANE:
        tm = _round_up(pl.cdiv(_round_up(B, SUBLANE), 2), SUBLANE)
    grid = (pl.cdiv(B, tm),)

    def resident(arr):
        # Whole array as one block with a constant block index -> DMA'd into
        # VMEM once and resident across the entire batch grid.
        return pl.BlockSpec(arr.shape, lambda i: (0, 0))

    out = pl.pallas_call(
        _mlp_kernel,
        out_shape=jax.ShapeDtypeStruct((B, 1), jnp.float32),
        grid=grid,
        in_specs=[
            # x: tiled over batch, f32, feature dim unpadded (773 == full dim).
            pl.BlockSpec((tm, K), lambda i: (i, 0)),
            resident(w1), resident(b1),
            resident(w2), resident(b2),
            resident(w3), resident(b3),
        ],
        out_specs=pl.BlockSpec((tm, 1), lambda i: (i, 0)),
        compiler_params=pltpu.CompilerParams(
            dimension_semantics=("parallel",),
        ),
    )(x, w1, b1, w2, b2, w3, b3)

    return out


def init_params(key, input_size=773, hidden_size=256):
    """Deterministic init mimicking nn.Linear's U(-1/sqrt(fan_in), 1/sqrt(fan_in))."""
    ks = jax.random.split(key, 6)

    def linear(kw, kb, fan_in, fan_out):
        bound = 1.0 / jnp.sqrt(fan_in)
        # stored as (in, out) so kernel does x @ W
        w = jax.random.uniform(kw, (fan_in, fan_out), jnp.float32, -bound, bound)
        b = jax.random.uniform(kb, (1, fan_out), jnp.float32, -bound, bound)
        return w, b

    w1, b1 = linear(ks[0], ks[1], input_size, hidden_size)
    w2, b2 = linear(ks[2], ks[3], hidden_size, hidden_size)
    w3, b3 = linear(ks[4], ks[5], hidden_size, 1)
    return {"w1": w1, "b1": b1, "w2": w2, "b2": b2, "w3": w3, "b3": b3}


def reference_forward_f32(x, p):
    """Exact fp32 semantics of the PyTorch module."""
    hp = jax.lax.Precision.HIGHEST
    h1 = jnp.maximum(jnp.dot(x, p["w1"], precision=hp) + p["b1"], 0.0)
    h2 = jnp.maximum(jnp.dot(h1, p["w2"], precision=hp) + p["b2"], 0.0)
    return jnp.tanh(jnp.dot(h2, p["w3"], precision=hp) + p["b3"])


def reference_forward_bf16(x, p):
    """Emulates the kernel's bf16-operand / fp32-accumulate arithmetic."""
    hp = jax.lax.Precision.HIGHEST
    f32, bf = jnp.float32, jnp.bfloat16
    xb = x.astype(bf).astype(f32)
    w1 = p["w1"].astype(bf).astype(f32)
    w2 = p["w2"].astype(bf).astype(f32)
    w3 = p["w3"].astype(bf).astype(f32)
    h1 = jnp.maximum(jnp.dot(xb, w1, precision=hp) + p["b1"], 0.0)
    h1 = h1.astype(bf).astype(f32)
    h2 = jnp.maximum(jnp.dot(h1, w2, precision=hp) + p["b2"], 0.0)
    h2 = h2.astype(bf).astype(f32)
    return jnp.tanh(jnp.dot(h2, w3, precision=hp) + p["b3"])


if __name__ == "__main__":
    key = jax.random.PRNGKey(0)
    k_x, k_p = jax.random.split(key)

    INPUT_SIZE = 773   # chess board encoding (module default)
    HIDDEN_SIZE = 256
    BATCH = 8

    raw_params = init_params(k_p, INPUT_SIZE, HIDDEN_SIZE)
    # Hoisted one-time weight prep (bf16 casts + fc3 lane padding).
    params = prepare_params(raw_params)

    x = jax.random.uniform(k_x, (BATCH, INPUT_SIZE), jnp.float32)

    out = chess_value_network(x, params)
    out = jax.block_until_ready(out)

    assert out.shape == (BATCH, 1)
    # Tight check vs a bf16-emulated reference (same arithmetic as the kernel).
    ref_bf16 = reference_forward_bf16(x, raw_params)
    assert jnp.allclose(out, ref_bf16, atol=2e-3, rtol=0), (
        jnp.max(jnp.abs(out - ref_bf16)))
    # Loose check vs the exact fp32 module semantics (bf16 weight quantization).
    ref_f32 = reference_forward_f32(x, raw_params)
    assert jnp.allclose(out, ref_f32, atol=5e-2, rtol=0), (
        jnp.max(jnp.abs(out - ref_f32)))

    print("KERNEL_OK")
</pallas_src>

<mosaic_0001>
module attributes {stable_mosaic.version = 11 : i64} {
  func.func @_mlp_kernel(%arg0: i32, %arg1: memref<8x773xf32, #tpu.memory_space<vmem>>, %arg2: memref<773x256xbf16, #tpu.memory_space<vmem>>, %arg3: memref<1x256xf32, #tpu.memory_space<vmem>>, %arg4: memref<256x256xbf16, #tpu.memory_space<vmem>>, %arg5: memref<1x256xf32, #tpu.memory_space<vmem>>, %arg6: memref<256x128xbf16, #tpu.memory_space<vmem>>, %arg7: memref<1x128xf32, #tpu.memory_space<vmem>>, %arg8: memref<8x1xf32, #tpu.memory_space<vmem>>) attributes {dimension_semantics = [#tpu.dimension_semantics<parallel>], iteration_bounds = array<i64: 1>, scalar_prefetch = 0 : i64, scratch_operands = 0 : i64, tpu.core_type = #tpu.core_type<tc>, window_params = [{transform_indices = @transform_0, window_bounds = array<i64: 8, 773>}, {pipeline_mode = #tpu.pipeline_mode<synchronous>, transform_indices = @transform_1, window_bounds = array<i64: 773, 256>}, {pipeline_mode = #tpu.pipeline_mode<synchronous>, transform_indices = @transform_2, window_bounds = array<i64: 1, 256>}, {pipeline_mode = #tpu.pipeline_mode<synchronous>, transform_indices = @transform_3, window_bounds = array<i64: 256, 256>}, {pipeline_mode = #tpu.pipeline_mode<synchronous>, transform_indices = @transform_4, window_bounds = array<i64: 1, 256>}, {pipeline_mode = #tpu.pipeline_mode<synchronous>, transform_indices = @transform_5, window_bounds = array<i64: 256, 128>}, {pipeline_mode = #tpu.pipeline_mode<synchronous>, transform_indices = @transform_6, window_bounds = array<i64: 1, 128>}, {transform_indices = @transform_7, window_bounds = array<i64: 8, 1>}]} {
    %c0 = arith.constant 0 : index
    %c0_0 = arith.constant 0 : index
    %0 = vector.load %arg1[%c0, %c0_0] : memref<8x773xf32, #tpu.memory_space<vmem>>, vector<8x773xf32>
    %1 = arith.truncf %0 : vector<8x773xf32> to vector<8x773xbf16>
    %c0_1 = arith.constant 0 : index
    %c0_2 = arith.constant 0 : index
    %2 = vector.load %arg2[%c0_1, %c0_2] : memref<773x256xbf16, #tpu.memory_space<vmem>>, vector<773x256xbf16>
    %cst = arith.constant dense<0.000000e+00> : vector<8x256xf32>
    %3 = tpu.matmul %1, %2, %cst {dimension_numbers = #tpu.dot_dimension_numbers<[1], [0], [0], [1], [0, 0, 1, 1], [], []>} : vector<8x773xbf16>, vector<773x256xbf16>, vector<8x256xf32> -> vector<8x256xf32>
    %c0_3 = arith.constant 0 : index
    %c0_4 = arith.constant 0 : index
    %4 = vector.load %arg3[%c0_3, %c0_4] : memref<1x256xf32, #tpu.memory_space<vmem>>, vector<1x256xf32>
    %5 = vector.broadcast %4 : vector<1x256xf32> to vector<8x256xf32>
    %6 = arith.addf %3, %5 : vector<8x256xf32>
    %cst_5 = arith.constant 0.000000e+00 : f32
    %7 = vector.broadcast %cst_5 : f32 to vector<8x256xf32>
    %8 = arith.maximumf %6, %7 : vector<8x256xf32>
    %9 = arith.truncf %8 : vector<8x256xf32> to vector<8x256xbf16>
    %c0_6 = arith.constant 0 : index
    %c0_7 = arith.constant 0 : index
    %10 = vector.load %arg4[%c0_6, %c0_7] : memref<256x256xbf16, #tpu.memory_space<vmem>>, vector<256x256xbf16>
    %cst_8 = arith.constant dense<0.000000e+00> : vector<8x256xf32>
    %11 = tpu.matmul %9, %10, %cst_8 {dimension_numbers = #tpu.dot_dimension_numbers<[1], [0], [0], [1], [0, 0, 1, 1], [], []>} : vector<8x256xbf16>, vector<256x256xbf16>, vector<8x256xf32> -> vector<8x256xf32>
    %c0_9 = arith.constant 0 : index
    %c0_10 = arith.constant 0 : index
    %12 = vector.load %arg5[%c0_9, %c0_10] : memref<1x256xf32, #tpu.memory_space<vmem>>, vector<1x256xf32>
    %13 = vector.broadcast %12 : vector<1x256xf32> to vector<8x256xf32>
    %14 = arith.addf %11, %13 : vector<8x256xf32>
    %cst_11 = arith.constant 0.000000e+00 : f32
    %15 = vector.broadcast %cst_11 : f32 to vector<8x256xf32>
    %16 = arith.maximumf %14, %15 : vector<8x256xf32>
    %17 = arith.truncf %16 : vector<8x256xf32> to vector<8x256xbf16>
    %c0_12 = arith.constant 0 : index
    %c0_13 = arith.constant 0 : index
    %18 = vector.load %arg6[%c0_12, %c0_13] : memref<256x128xbf16, #tpu.memory_space<vmem>>, vector<256x128xbf16>
    %cst_14 = arith.constant dense<0.000000e+00> : vector<8x128xf32>
    %19 = tpu.matmul %17, %18, %cst_14 {dimension_numbers = #tpu.dot_dimension_numbers<[1], [0], [0], [1], [0, 0, 1, 1], [], []>} : vector<8x256xbf16>, vector<256x128xbf16>, vector<8x128xf32> -> vector<8x128xf32>
    %c0_15 = arith.constant 0 : index
    %c0_16 = arith.constant 0 : index
    %20 = vector.load %arg7[%c0_15, %c0_16] : memref<1x128xf32, #tpu.memory_space<vmem>>, vector<1x128xf32>
    %21 = vector.broadcast %20 : vector<1x128xf32> to vector<8x128xf32>
    %22 = arith.addf %19, %21 : vector<8x128xf32>
    %23 = math.tanh %22 : vector<8x128xf32>
    %24 = vector.extract_strided_slice %23 {offsets = [0, 0], sizes = [8, 1], strides = [1, 1]} : vector<8x128xf32> to vector<8x1xf32>
    %c0_17 = arith.constant 0 : index
    %c0_18 = arith.constant 0 : index
    %25 = vector.load %arg8[%c0_17, %c0_18] : memref<8x1xf32, #tpu.memory_space<vmem>>, vector<8x1xf32>
    tpu.vector_store %arg8[%c0_17, %c0_18], %24 {strides = array<i32>} : memref<8x1xf32, #tpu.memory_space<vmem>>, vector<8x1xf32>,
    return
  }
  func.func @transform_0(%arg0: i32) -> (i32, i32) {
    %c0_i32 = arith.constant 0 : i32
    %c0_i32_0 = arith.constant 0 : i32
    return %arg0, %c0_i32 : i32, i32
  }
  func.func @transform_1(%arg0: i32) -> (i32, i32) {
    %c0_i32 = arith.constant 0 : i32
    %c0_i32_0 = arith.constant 0 : i32
    %c0_i32_1 = arith.constant 0 : i32
    return %c0_i32, %c0_i32_0 : i32, i32
  }
  func.func @transform_2(%arg0: i32) -> (i32, i32) {
    %c0_i32 = arith.constant 0 : i32
    %c0_i32_0 = arith.constant 0 : i32
    %c0_i32_1 = arith.constant 0 : i32
    return %c0_i32, %c0_i32_0 : i32, i32
  }
  func.func @transform_3(%arg0: i32) -> (i32, i32) {
    %c0_i32 = arith.constant 0 : i32
    %c0_i32_0 = arith.constant 0 : i32
    %c0_i32_1 = arith.constant 0 : i32
    return %c0_i32, %c0_i32_0 : i32, i32
  }
  func.func @transform_4(%arg0: i32) -> (i32, i32) {
    %c0_i32 = arith.constant 0 : i32
    %c0_i32_0 = arith.constant 0 : i32
    %c0_i32_1 = arith.constant 0 : i32
    return %c0_i32, %c0_i32_0 : i32, i32
  }
  func.func @transform_5(%arg0: i32) -> (i32, i32) {
    %c0_i32 = arith.constant 0 : i32
    %c0_i32_0 = arith.constant 0 : i32
    %c0_i32_1 = arith.constant 0 : i32
    return %c0_i32, %c0_i32_0 : i32, i32
  }
  func.func @transform_6(%arg0: i32) -> (i32, i32) {
    %c0_i32 = arith.constant 0 : i32
    %c0_i32_0 = arith.constant 0 : i32
    %c0_i32_1 = arith.constant 0 : i32
    return %c0_i32, %c0_i32_0 : i32, i32
  }
  func.func @transform_7(%arg0: i32) -> (i32, i32) {
    %c0_i32 = arith.constant 0 : i32
    %c0_i32_0 = arith.constant 0 : i32
    return %arg0, %c0_i32 : i32, i32
  }
}

</mosaic_0001>

<llo_original>
// kernel: tpu_custom_call.1
$region0: #{tpu_custom_call.1}
  #allocation0 [shape = 'u32[]', space=smem, size = 0x4, offset = 0x4, fixed_abs, tag = 'smem constant byte address 0x4 - core index']
  #allocation1 [shape = 'u32[144,128]{1,0:T(1,128)}', space=vmem, size = 0x12000, scoped, tag = 'internal scratch']
  %s0 = inlined_call_operand.hbm [shape: f32[8,773], index: 0, kind: input, shape index: {}]
  %s1 = inlined_call_operand.hbm [shape: bf16[773,256], index: 1, kind: input, shape index: {}]
  %s2 = inlined_call_operand.vmem [shape: f32[1,256], index: 2, kind: input, shape index: {}]
  %s3 = inlined_call_operand.hbm [shape: bf16[256,256], index: 3, kind: input, shape index: {}]
  %s4 = inlined_call_operand.vmem [shape: f32[1,256], index: 4, kind: input, shape index: {}]
  %s5 = inlined_call_operand.hbm [shape: bf16[256,128], index: 5, kind: input, shape index: {}]
  %s6 = inlined_call_operand.vmem [shape: f32[1,128], index: 6, kind: input, shape index: {}]
  %s7 = inlined_call_operand.vmem [shape: f32[8,1], index: 7, kind: output, shape index: {}]
  %s8 = sld [smem:[#allocation0]]
  $region54: #{tpu_custom_call.1} parent=0
    _
  %s10 = ssub.s32 1, %s8
  %s11 = scalar_select 0, %s10, %s8
  $region1: #{tpu_custom_call.1} parent=0
    #allocation2 [shape = 'u8[28672]{0}', space=vmem, size = 0x7000, scoped, tag = 'input window, operand 0, single buffered']
    #allocation3 [shape = 's32[1]{0}', space=sflag, size = 0x4, scoped, tag = 'scoped memory for tpu_custom_call.1']
    #allocation4 [shape = 'u8[397312]{0}', space=vmem, size = 0x61000, scoped, tag = 'input window, operand 1, single buffered']
    #allocation5 [shape = 's32[1]{0}', space=sflag, size = 0x4, scoped, tag = 'scoped memory for tpu_custom_call.1']
    #allocation6 [shape = 'u8[131072]{0}', space=vmem, size = 0x20000, scoped, tag = 'input window, operand 3, single buffered']
    #allocation7 [shape = 'u8[65536]{0}', space=vmem, size = 0x10000, scoped, tag = 'input window, operand 5, single buffered']
    #allocation8 [shape = 's32[1]{0}', space=sflag, size = 0x4, scoped, tag = 'scoped memory for tpu_custom_call.1']
    %12 = vsyncpa [#allocation3], 0
    %13 = vsyncpa [#allocation5], 0
    %14 = vsyncpa [#allocation8], 0
    // Predicated region
    $region2: #{tpu_custom_call.1} parent=1 // pred_check
      _
    $region3: #{tpu_custom_call.1} parent=1 // pred_check_branch
      %16 = sbr.rel (0) target = $region5
    $region4: #{tpu_custom_call.1} parent=1 // pred_region
      %s18 = ssub.s32 896, 896
      %19 = vsyncadd [#allocation3], %s18
      %s21 = sshll.u32 [#allocation2], 4
      %s22 = int_to_ptr.vmem [resolvable:$true] %s21
      %24 = dma.hbm_to_vmem [thread:$0]  %s0, 896, %s22, [#allocation3]
    $region5: #{tpu_custom_call.1} parent=1 // pred_fallthru
      _
    // Predicated region
    $region6: #{tpu_custom_call.1} parent=1 // pred_check
      _
    $region7: #{tpu_custom_call.1} parent=1 // pred_check_branch
      %26 = sbr.rel (0) target = $region9
    $region8: #{tpu_custom_call.1} parent=1 // pred_region
      %s28 = ssub.s32 12416, 12416
      %29 = vsyncadd [#allocation5], %s28
      %s30 = sshll.u32 [#allocation4], 4
      %s31 = int_to_ptr.vmem [resolvable:$true] %s30
      %36 = dma.hbm_to_vmem [thread:$0]  %s1, 12416, %s31, [#allocation5], 128, 128, 8
    $region9: #{tpu_custom_call.1} parent=1 // pred_fallthru
      _
    // Predicated region
    $region10: #{tpu_custom_call.1} parent=1 // pred_check
      _
    $region11: #{tpu_custom_call.1} parent=1 // pred_check_branch
      %38 = sbr.rel (0) target = $region13
    $region12: #{tpu_custom_call.1} parent=1 // pred_region
      _
    $region13: #{tpu_custom_call.1} parent=1 // pred_fallthru
      _
    // Predicated region
    $region14: #{tpu_custom_call.1} parent=1 // pred_check
      _
    $region15: #{tpu_custom_call.1} parent=1 // pred_check_branch
      %40 = sbr.rel (0) target = $region17
    $region16: #{tpu_custom_call.1} parent=1 // pred_region
      %s42 = ssub.s32 4096, 4096
      %43 = vsyncadd [#allocation5], %s42
      %s44 = sshll.u32 [#allocation6], 4
      %s45 = int_to_ptr.vmem [resolvable:$true] %s44
      %50 = dma.hbm_to_vmem [thread:$0]  %s3, 4096, %s45, [#allocation5], 128, 128, 8
    $region17: #{tpu_custom_call.1} parent=1 // pred_fallthru
      _
    // Predicated region
    $region18: #{tpu_custom_call.1} parent=1 // pred_check
      _
    $region19: #{tpu_custom_call.1} parent=1 // pred_check_branch
      %52 = sbr.rel (0) target = $region21
    $region20: #{tpu_custom_call.1} parent=1 // pred_region
      _
    $region21: #{tpu_custom_call.1} parent=1 // pred_fallthru
      _
    // Predicated region
    $region22: #{tpu_custom_call.1} parent=1 // pred_check
      _
    $region23: #{tpu_custom_call.1} parent=1 // pred_check_branch
      %54 = sbr.rel (0) target = $region25
    $region24: #{tpu_custom_call.1} parent=1 // pred_region
      %s56 = ssub.s32 2048, 2048
      %57 = vsyncadd [#allocation8], %s56
      %s58 = sshll.u32 [#allocation7], 4
      %s59 = int_to_ptr.vmem [resolvable:$true] %s58
      %64 = dma.hbm_to_vmem [thread:$0]  %s5, 2048, %s59, [#allocation8], 64, 64, 4
    $region25: #{tpu_custom_call.1} parent=1 // pred_fallthru
      _
    // Predicated region
    $region26: #{tpu_custom_call.1} parent=1 // pred_check
      _
    $region27: #{tpu_custom_call.1} parent=1 // pred_check_branch
      %66 = sbr.rel (0) target = $region29
    $region28: #{tpu_custom_call.1} parent=1 // pred_region
      _
    $region29: #{tpu_custom_call.1} parent=1 // pred_fallthru
      _
    // Predicated region
    $region30: #{tpu_custom_call.1} parent=1 // pred_check
      _
    $region31: #{tpu_custom_call.1} parent=1 // pred_check_branch
      %68 = sbr.rel (0) target = $region33
    $region32: #{tpu_custom_call.1} parent=1 // pred_region
      %69 = dma.done [#allocation3], 896
    $region33: #{tpu_custom_call.1} parent=1 // pred_fallthru
      _
    // Predicated region
    $region34: #{tpu_custom_call.1} parent=1 // pred_check
      _
    $region35: #{tpu_custom_call.1} parent=1 // pred_check_branch
      %71 = sbr.rel (0) target = $region37
    $region36: #{tpu_custom_call.1} parent=1 // pred_region
      %72 = dma.done [#allocation5], 12416
    $region37: #{tpu_custom_call.1} parent=1 // pred_fallthru
      _
    // Predicated region
    $region38: #{tpu_custom_call.1} parent=1 // pred_check
      _
    $region39: #{tpu_custom_call.1} parent=1 // pred_check_branch
      %74 = sbr.rel (0) target = $region41
    $region40: #{tpu_custom_call.1} parent=1 // pred_region
      %75 = dma.done [#allocation5], 4096
    $region41: #{tpu_custom_call.1} parent=1 // pred_fallthru
      _
    // Predicated region
    $region42: #{tpu_custom_call.1} parent=1 // pred_check
      _
    $region43: #{tpu_custom_call.1} parent=1 // pred_check_branch
      %77 = sbr.rel (0) target = $region45
    $region44: #{tpu_custom_call.1} parent=1 // pred_region
      %78 = dma.done [#allocation8], 2048
    $region45: #{tpu_custom_call.1} parent=1 // pred_fallthru
      _
    %v80 = vld [vmem:[#allocation2] sm:$0xff]
    %v81 = vld [vmem:[#allocation2 + $0x8] sm:$0xff]
    %v82 = vld [vmem:[#allocation2 + $0x10] sm:$0xff]
    %v83 = vld [vmem:[#allocation2 + $0x18] sm:$0xff]
    %v84 = vld [vmem:[#allocation2 + $0x20] sm:$0xff]
    %v85 = vld [vmem:[#allocation2 + $0x28] sm:$0xff]
    %v86 = vld [vmem:[#allocation2 + $0x30] sm:$0xff]
    %v87 = vpack.c.bf16 %v80, %v80
    %v88 = vpack.c.bf16 %v81, %v81
    %v89 = vpack.c.bf16 %v82, %v82
    %v90 = vpack.c.bf16 %v83, %v83
    %v91 = vpack.c.bf16 %v84, %v84
    %v92 = vpack.c.bf16 %v85, %v85
    %v93 = vpack.c.bf16 %v86, %v86
    %v94 = vld [vmem:[#allocation4] sm:$0xff]
    %v95 = vld [vmem:[#allocation4 + $0x8] sm:$0xff]
    %v96 = vld [vmem:[#allocation4 + $0x10] sm:$0xff]
    %v97 = vld [vmem:[#allocation4 + $0x18] sm:$0xff]
    %v98 = vld [vmem:[#allocation4 + $0x20] sm:$0xff]
    %v99 = vld [vmem:[#allocation4 + $0x28] sm:$0xff]
    %v100 = vld [vmem:[#allocation4 + $0x30] sm:$0xff]
    %v101 = vld [vmem:[#allocation4 + $0x38] sm:$0xff]
    %v102 = vld [vmem:[#allocation4 + $0x40] sm:$0xff]
    %v103 = vld [vmem:[#allocation4 + $0x48] sm:$0xff]
    %v104 = vld [vmem:[#allocation4 + $0x50] sm:$0xff]
    %v105 = vld [vmem:[#allocation4 + $0x58] sm:$0xff]
    %v106 = vld [vmem:[#allocation4 + $0x60] sm:$0xff]
    %v107 = vld [vmem:[#allocation4 + $0x68] sm:$0xff]
    %v108 = vld [vmem:[#allocation4 + $0x70] sm:$0xff]
    %v109 = vld [vmem:[#allocation4 + $0x78] sm:$0xff]
    %v110 = vld [vmem:[#allocation4 + $0x80] sm:$0xff]
    %v111 = vld [vmem:[#allocation4 + $0x88] sm:$0xff]
    %v112 = vld [vmem:[#allocation4 + $0x90] sm:$0xff]
    %v113 = vld [vmem:[#allocation4 + $0x98] sm:$0xff]
    %v114 = vld [vmem:[#allocation4 + $0xa0] sm:$0xff]
    %v115 = vld [vmem:[#allocation4 + $0xa8] sm:$0xff]
    %v116 = vld [vmem:[#allocation4 + $0xb0] sm:$0xff]
    %v117 = vld [vmem:[#allocation4 + $0xb8] sm:$0xff]
    %v118 = vld [vmem:[#allocation4 + $0xc0] sm:$0xff]
    %v119 = vld [vmem:[#allocation4 + $0xc8] sm:$0xff]
    %v120 = vld [vmem:[#allocation4 + $0xd0] sm:$0xff]
    %v121 = vld [vmem:[#allocation4 + $0xd8] sm:$0xff]
    %v122 = vld [vmem:[#allocation4 + $0xe0] sm:$0xff]
    %v123 = vld [vmem:[#allocation4 + $0xe8] sm:$0xff]
    %v124 = vld [vmem:[#allocation4 + $0xf0] sm:$0xff]
    %v125 = vld [vmem:[#allocation4 + $0xf8] sm:$0xff]
    %v126 = vld [vmem:[#allocation4 + $0x100] sm:$0xff]
    %v127 = vld [vmem:[#allocation4 + $0x108] sm:$0xff]
    %v128 = vld [vmem:[#allocation4 + $0x110] sm:$0xff]
    %v129 = vld [vmem:[#allocation4 + $0x118] sm:$0xff]
    %v130 = vld [vmem:[#allocation4 + $0x120] sm:$0xff]
    %v131 = vld [vmem:[#allocation4 + $0x128] sm:$0xff]
    %v132 = vld [vmem:[#allocation4 + $0x130] sm:$0xff]
    %v133 = vld [vmem:[#allocation4 + $0x138] sm:$0xff]
    %v134 = vld [vmem:[#allocation4 + $0x140] sm:$0xff]
    %v135 = vld [vmem:[#allocation4 + $0x148] sm:$0xff]
    %v136 = vld [vmem:[#allocation4 + $0x150] sm:$0xff]
    %v137 = vld [vmem:[#allocation4 + $0x158] sm:$0xff]
    %v138 = vld [vmem:[#allocation4 + $0x160] sm:$0xff]
    %v139 = vld [vmem:[#allocation4 + $0x168] sm:$0xff]
    %v140 = vld [vmem:[#allocation4 + $0x170] sm:$0xff]
    %v141 = vld [vmem:[#allocation4 + $0x178] sm:$0xff]
    %v142 = vld [vmem:[#allocation4 + $0x180] sm:$0xff]
    %v143 = vld [vmem:[#allocation4 + $0x188] sm:$0xff]
    %v144 = vld [vmem:[#allocation4 + $0x190] sm:$0xff]
    %v145 = vld [vmem:[#allocation4 + $0x198] sm:$0xff]
    %v146 = vld [vmem:[#allocation4 + $0x1a0] sm:$0xff]
    %v147 = vld [vmem:[#allocation4 + $0x1a8] sm:$0xff]
    %v148 = vld [vmem:[#allocation4 + $0x1b0] sm:$0xff]
    %v149 = vld [vmem:[#allocation4 + $0x1b8] sm:$0xff]
    %v150 = vld [vmem:[#allocation4 + $0x1c0] sm:$0xff]
    %v151 = vld [vmem:[#allocation4 + $0x1c8] sm:$0xff]
    %v152 = vld [vmem:[#allocation4 + $0x1d0] sm:$0xff]
    %v153 = vld [vmem:[#allocation4 + $0x1d8] sm:$0xff]
    %v154 = vld [vmem:[#allocation4 + $0x1e0] sm:$0xff]
    %v155 = vld [vmem:[#allocation4 + $0x1e8] sm:$0xff]
    %v156 = vld [vmem:[#allocation4 + $0x1f0] sm:$0xff]
    %v157 = vld [vmem:[#allocation4 + $0x1f8] sm:$0xff]
    %v158 = vld [vmem:[#allocation4 + $0x200] sm:$0xff]
    %v159 = vld [vmem:[#allocation4 + $0x208] sm:$0xff]
    %v160 = vld [vmem:[#allocation4 + $0x210] sm:$0xff]
    %v161 = vld [vmem:[#allocation4 + $0x218] sm:$0xff]
    %v162 = vld [vmem:[#allocation4 + $0x220] sm:$0xff]
    %v163 = vld [vmem:[#allocation4 + $0x228] sm:$0xff]
    %v164 = vld [vmem:[#allocation4 + $0x230] sm:$0xff]
    %v165 = vld [vmem:[#allocation4 + $0x238] sm:$0xff]
    %v166 = vld [vmem:[#allocation4 + $0x240] sm:$0xff]
    %v167 = vld [vmem:[#allocation4 + $0x248] sm:$0xff]
    %v168 = vld [vmem:[#allocation4 + $0x250] sm:$0xff]
    %v169 = vld [vmem:[#allocation4 + $0x258] sm:$0xff]
    %v170 = vld [vmem:[#allocation4 + $0x260] sm:$0xff]
    %v171 = vld [vmem:[#allocation4 + $0x268] sm:$0xff]
    %v172 = vld [vmem:[#allocation4 + $0x270] sm:$0xff]
    %v173 = vld [vmem:[#allocation4 + $0x278] sm:$0xff]
    %v174 = vld [vmem:[#allocation4 + $0x280] sm:$0xff]
    %v175 = vld [vmem:[#allocation4 + $0x288] sm:$0xff]
    %v176 = vld [vmem:[#allocation4 + $0x290] sm:$0xff]
    %v177 = vld [vmem:[#allocation4 + $0x298] sm:$0xff]
    %v178 = vld [vmem:[#allocation4 + $0x2a0] sm:$0xff]
    %v179 = vld [vmem:[#allocation4 + $0x2a8] sm:$0xff]
    %v180 = vld [vmem:[#allocation4 + $0x2b0] sm:$0xff]
    %v181 = vld [vmem:[#allocation4 + $0x2b8] sm:$0xff]
    %v182 = vld [vmem:[#allocation4 + $0x2c0] sm:$0xff]
    %v183 = vld [vmem:[#allocation4 + $0x2c8] sm:$0xff]
    %v184 = vld [vmem:[#allocation4 + $0x2d0] sm:$0xff]
    %v185 = vld [vmem:[#allocation4 + $0x2d8] sm:$0xff]
    %v186 = vld [vmem:[#allocation4 + $0x2e0] sm:$0xff]
    %v187 = vld [vmem:[#allocation4 + $0x2e8] sm:$0xff]
    %v188 = vld [vmem:[#allocation4 + $0x2f0] sm:$0xff]
    %v189 = vld [vmem:[#allocation4 + $0x2f8] sm:$0xff]
    %v190 = vld [vmem:[#allocation4 + $0x300] sm:$0x77]
    %v191 = vld [vmem:[%s2] sm:$0x3]
    %v193 = vlaneseq
    %v194 = vshrl.u32 %v193, 7
    %v195 = vsub.s32 0, %v194
    %v196 = vrot.slane %v191, %v195
    %v197 = vlaneseq
    %v198 = vshrl.u32 %v197, 7
    %v199 = vsub.s32 1, %v198
    %v200 = vrot.slane %v191, %v199
    %v300 = vunpack.c.l.b16 %v94
    %v301 = vunpack.c.h.b16 %v94
    %v302 = vunpack.c.l.b16 %v95
    %v303 = vunpack.c.h.b16 %v95
    %v304 = vunpack.c.l.b16 %v96
    %v305 = vunpack.c.h.b16 %v96
    %v306 = vunpack.c.l.b16 %v97
    %v307 = vunpack.c.h.b16 %v97
    %v308 = vunpack.c.l.b16 %v98
    %v309 = vunpack.c.h.b16 %v98
    %v310 = vunpack.c.l.b16 %v99
    %v311 = vunpack.c.h.b16 %v99
    %v312 = vunpack.c.l.b16 %v100
    %v313 = vunpack.c.h.b16 %v100
    %v314 = vunpack.c.l.b16 %v101
    %v315 = vunpack.c.h.b16 %v101
    %v316 = vunpack.c.l.b16 %v102
    %v317 = vunpack.c.h.b16 %v102
    %v318 = vunpack.c.l.b16 %v103
    %v319 = vunpack.c.h.b16 %v103
    %v320 = vunpack.c.l.b16 %v104
    %v321 = vunpack.c.h.b16 %v104
    %v322 = vunpack.c.l.b16 %v105
    %v323 = vunpack.c.h.b16 %v105
    %v324 = vunpack.c.l.b16 %v106
    %v325 = vunpack.c.h.b16 %v106
    %v326 = vunpack.c.l.b16 %v107
    %v327 = vunpack.c.h.b16 %v107
    %v328 = vunpack.c.l.b16 %v108
    %v329 = vunpack.c.h.b16 %v108
    %v330 = vunpack.c.l.b16 %v109
    %v331 = vunpack.c.h.b16 %v109
    %v332 = vunpack.c.l.b16 %v110
    %v333 = vunpack.c.h.b16 %v110
    %v334 = vunpack.c.l.b16 %v111
    %v335 = vunpack.c.h.b16 %v111
    %v336 = vunpack.c.l.b16 %v112
    %v337 = vunpack.c.h.b16 %v112
    %v338 = vunpack.c.l.b16 %v113
    %v339 = vunpack.c.h.b16 %v113
    %v340 = vunpack.c.l.b16 %v114
    %v341 = vunpack.c.h.b16 %v114
    %v342 = vunpack.c.l.b16 %v115
    %v343 = vunpack.c.h.b16 %v115
    %v344 = vunpack.c.l.b16 %v116
    %v345 = vunpack.c.h.b16 %v116
    %v346 = vunpack.c.l.b16 %v117
    %v347 = vunpack.c.h.b16 %v117
    %v348 = vunpack.c.l.b16 %v118
    %v349 = vunpack.c.h.b16 %v118
    %v350 = vunpack.c.l.b16 %v119
    %v351 = vunpack.c.h.b16 %v119
    %v352 = vunpack.c.l.b16 %v120
    %v353 = vunpack.c.h.b16 %v120
    %v354 = vunpack.c.l.b16 %v121
    %v355 = vunpack.c.h.b16 %v121
    %v356 = vunpack.c.l.b16 %v122
    %v357 = vunpack.c.h.b16 %v122
    %v358 = vunpack.c.l.b16 %v123
    %v359 = vunpack.c.h.b16 %v123
    %v360 = vunpack.c.l.b16 %v124
    %v361 = vunpack.c.h.b16 %v124
    %v362 = vunpack.c.l.b16 %v125
    %v363 = vunpack.c.h.b16 %v125
    %v364 = vunpack.c.l.b16 %v126
    %v365 = vunpack.c.h.b16 %v126
    %v366 = vunpack.c.l.b16 %v127
    %v367 = vunpack.c.h.b16 %v127
    %v368 = vunpack.c.l.b16 %v128
    %v369 = vunpack.c.h.b16 %v128
    %v370 = vunpack.c.l.b16 %v129
    %v371 = vunpack.c.h.b16 %v129
    %v372 = vunpack.c.l.b16 %v130
    %v373 = vunpack.c.h.b16 %v130
    %v374 = vunpack.c.l.b16 %v131
    %v375 = vunpack.c.h.b16 %v131
    %v376 = vunpack.c.l.b16 %v132
    %v377 = vunpack.c.h.b16 %v132
    %v378 = vunpack.c.l.b16 %v133
    %v379 = vunpack.c.h.b16 %v133
    %v380 = vunpack.c.l.b16 %v134
    %v381 = vunpack.c.h.b16 %v134
    %v382 = vunpack.c.l.b16 %v135
    %v383 = vunpack.c.h.b16 %v135
    %v384 = vunpack.c.l.b16 %v136
    %v385 = vunpack.c.h.b16 %v136
    %v386 = vunpack.c.l.b16 %v137
    %v387 = vunpack.c.h.b16 %v137
    %v388 = vunpack.c.l.b16 %v138
    %v389 = vunpack.c.h.b16 %v138
    %v390 = vunpack.c.l.b16 %v139
    %v391 = vunpack.c.h.b16 %v139
    %v392 = vunpack.c.l.b16 %v140
    %v393 = vunpack.c.h.b16 %v140
    %v394 = vunpack.c.l.b16 %v141
    %v395 = vunpack.c.h.b16 %v141
    %v396 = vunpack.c.l.b16 %v142
    %v397 = vunpack.c.h.b16 %v142
    %v398 = vunpack.c.l.b16 %v143
    %v399 = vunpack.c.h.b16 %v143
    %v400 = vunpack.c.l.b16 %v144
    %v401 = vunpack.c.h.b16 %v144
    %v402 = vunpack.c.l.b16 %v145
    %v403 = vunpack.c.h.b16 %v145
    %v404 = vunpack.c.l.b16 %v146
    %v405 = vunpack.c.h.b16 %v146
    %v406 = vunpack.c.l.b16 %v147
    %v407 = vunpack.c.h.b16 %v147
    %v408 = vunpack.c.l.b16 %v148
    %v409 = vunpack.c.h.b16 %v148
    %v410 = vunpack.c.l.b16 %v149
    %v411 = vunpack.c.h.b16 %v149
    %v412 = vunpack.c.l.b16 %v150
    %v413 = vunpack.c.h.b16 %v150
    %v414 = vunpack.c.l.b16 %v151
    %v415 = vunpack.c.h.b16 %v151
    %v416 = vunpack.c.l.b16 %v152
    %v417 = vunpack.c.h.b16 %v152
    %v418 = vunpack.c.l.b16 %v153
    %v419 = vunpack.c.h.b16 %v153
    %v420 = vunpack.c.l.b16 %v154
    %v421 = vunpack.c.h.b16 %v154
    %v422 = vunpack.c.l.b16 %v155
    %v423 = vunpack.c.h.b16 %v155
    %v424 = vunpack.c.l.b16 %v156
    %v425 = vunpack.c.h.b16 %v156
    %v426 = vunpack.c.l.b16 %v157
    %v427 = vunpack.c.h.b16 %v157
    %v428 = vunpack.c.l.b16 %v158
    %v429 = vunpack.c.h.b16 %v158
    %v430 = vunpack.c.l.b16 %v159
    %v431 = vunpack.c.h.b16 %v159
    %v432 = vunpack.c.l.b16 %v160
    %v433 = vunpack.c.h.b16 %v160
    %v434 = vunpack.c.l.b16 %v161
    %v435 = vunpack.c.h.b16 %v161
    %v436 = vunpack.c.l.b16 %v162
    %v437 = vunpack.c.h.b16 %v162
    %v438 = vunpack.c.l.b16 %v163
    %v439 = vunpack.c.h.b16 %v163
    %v440 = vunpack.c.l.b16 %v164
    %v441 = vunpack.c.h.b16 %v164
    %v442 = vunpack.c.l.b16 %v165
    %v443 = vunpack.c.h.b16 %v165
    %v444 = vunpack.c.l.b16 %v166
    %v445 = vunpack.c.h.b16 %v166
    %v446 = vunpack.c.l.b16 %v167
    %v447 = vunpack.c.h.b16 %v167
    %v448 = vunpack.c.l.b16 %v168
    %v449 = vunpack.c.h.b16 %v168
    %v450 = vunpack.c.l.b16 %v169
    %v451 = vunpack.c.h.b16 %v169
    %v452 = vunpack.c.l.b16 %v170
    %v453 = vunpack.c.h.b16 %v170
    %v454 = vunpack.c.l.b16 %v171
    %v455 = vunpack.c.h.b16 %v171
    %v456 = vunpack.c.l.b16 %v172
    %v457 = vunpack.c.h.b16 %v172
    %v458 = vunpack.c.l.b16 %v173
    %v459 = vunpack.c.h.b16 %v173
    %v460 = vunpack.c.l.b16 %v174
    %v461 = vunpack.c.h.b16 %v174
    %v462 = vunpack.c.l.b16 %v175
    %v463 = vunpack.c.h.b16 %v175
    %v464 = vunpack.c.l.b16 %v176
    %v465 = vunpack.c.h.b16 %v176
    %v466 = vunpack.c.l.b16 %v177
    %v467 = vunpack.c.h.b16 %v177
    %v468 = vunpack.c.l.b16 %v178
    %v469 = vunpack.c.h.b16 %v178
    %v470 = vunpack.c.l.b16 %v179
    %v471 = vunpack.c.h.b16 %v179
    %v472 = vunpack.c.l.b16 %v180
    %v473 = vunpack.c.h.b16 %v180
    %v474 = vunpack.c.l.b16 %v181
    %v475 = vunpack.c.h.b16 %v181
    %v476 = vunpack.c.l.b16 %v182
    %v477 = vunpack.c.h.b16 %v182
    %v478 = vunpack.c.l.b16 %v183
    %v479 = vunpack.c.h.b16 %v183
    %v480 = vunpack.c.l.b16 %v184
    %v481 = vunpack.c.h.b16 %v184
    %v482 = vunpack.c.l.b16 %v185
    %v483 = vunpack.c.h.b16 %v185
    %v484 = vunpack.c.l.b16 %v186
    %v485 = vunpack.c.h.b16 %v186
    %v486 = vunpack.c.l.b16 %v187
    %v487 = vunpack.c.h.b16 %v187
    %v488 = vunpack.c.l.b16 %v188
    %v489 = vunpack.c.h.b16 %v188
    %v490 = vunpack.c.l.b16 %v189
    %v491 = vunpack.c.h.b16 %v189
    %v492 = vunpack.c.l.b16 %v190
    %v493 = vunpack.c.h.b16 %v190
    %v494 = vpack.c.b16 %v302, %v300
    %v495 = vpack.c.b16 %v303, %v301
    %v496 = vpack.c.b16 %v306, %v304
    %v497 = vpack.c.b16 %v307, %v305
    %v498 = vpack.c.b16 %v310, %v308
    %v499 = vpack.c.b16 %v311, %v309
    %v500 = vpack.c.b16 %v314, %v312
    %v501 = vpack.c.b16 %v315, %v313
    %v502 = vpack.c.b16 %v318, %v316
    %v503 = vpack.c.b16 %v319, %v317
    %v504 = vpack.c.b16 %v322, %v320
    %v505 = vpack.c.b16 %v323, %v321
    %v506 = vpack.c.b16 %v326, %v324
    %v507 = vpack.c.b16 %v327, %v325
    %v508 = vpack.c.b16 %v330, %v328
    %v509 = vpack.c.b16 %v331, %v329
    %v510 = vpack.c.b16 %v334, %v332
    %v511 = vpack.c.b16 %v335, %v333
    %v512 = vpack.c.b16 %v338, %v336
    %v513 = vpack.c.b16 %v339, %v337
    %v514 = vpack.c.b16 %v342, %v340
    %v515 = vpack.c.b16 %v343, %v341
    %v516 = vpack.c.b16 %v346, %v344
    %v517 = vpack.c.b16 %v347, %v345
    %v518 = vpack.c.b16 %v350, %v348
    %v519 = vpack.c.b16 %v351, %v349
    %v520 = vpack.c.b16 %v354, %v352
    %v521 = vpack.c.b16 %v355, %v353
    %v522 = vpack.c.b16 %v358, %v356
    %v523 = vpack.c.b16 %v359, %v357
    %v524 = vpack.c.b16 %v362, %v360
    %v525 = vpack.c.b16 %v363, %v361
    %v526 = vpack.c.b16 %v366, %v364
    %v527 = vpack.c.b16 %v367, %v365
    %v528 = vpack.c.b16 %v370, %v368
    %v529 = vpack.c.b16 %v371, %v369
    %v530 = vpack.c.b16 %v374, %v372
    %v531 = vpack.c.b16 %v375, %v373
    %v532 = vpack.c.b16 %v378, %v376
    %v533 = vpack.c.b16 %v379, %v377
    %v534 = vpack.c.b16 %v382, %v380
    %v535 = vpack.c.b16 %v383, %v381
    %v536 = vpack.c.b16 %v386, %v384
    %v537 = vpack.c.b16 %v387, %v385
    %v538 = vpack.c.b16 %v390, %v388
    %v539 = vpack.c.b16 %v391, %v389
    %v540 = vpack.c.b16 %v394, %v392
    %v541 = vpack.c.b16 %v395, %v393
    %v542 = vpack.c.b16 %v398, %v396
    %v543 = vpack.c.b16 %v399, %v397
    %v544 = vpack.c.b16 %v402, %v400
    %v545 = vpack.c.b16 %v403, %v401
    %v546 = vpack.c.b16 %v406, %v404
    %v547 = vpack.c.b16 %v407, %v405
    %v548 = vpack.c.b16 %v410, %v408
    %v549 = vpack.c.b16 %v411, %v409
    %v550 = vpack.c.b16 %v414, %v412
    %v551 = vpack.c.b16 %v415, %v413
    %v552 = vpack.c.b16 %v418, %v416
    %v553 = vpack.c.b16 %v419, %v417
    %v554 = vpack.c.b16 %v422, %v420
    %v555 = vpack.c.b16 %v423, %v421
    %v556 = vpack.c.b16 %v426, %v424
    %v557 = vpack.c.b16 %v427, %v425
    %v558 = vpack.c.b16 %v430, %v428
    %v559 = vpack.c.b16 %v431, %v429
    %v560 = vpack.c.b16 %v434, %v432
    %v561 = vpack.c.b16 %v435, %v433
    %v562 = vpack.c.b16 %v438, %v436
    %v563 = vpack.c.b16 %v439, %v437
    %v564 = vpack.c.b16 %v442, %v440
    %v565 = vpack.c.b16 %v443, %v441
    %v566 = vpack.c.b16 %v446, %v444
    %v567 = vpack.c.b16 %v447, %v445
    %v568 = vpack.c.b16 %v450, %v448
    %v569 = vpack.c.b16 %v451, %v449
    %v570 = vpack.c.b16 %v454, %v452
    %v571 = vpack.c.b16 %v455, %v453
    %v572 = vpack.c.b16 %v458, %v456
    %v573 = vpack.c.b16 %v459, %v457
    %v574 = vpack.c.b16 %v462, %v460
    %v575 = vpack.c.b16 %v463, %v461
    %v576 = vpack.c.b16 %v466, %v464
    %v577 = vpack.c.b16 %v467, %v465
    %v578 = vpack.c.b16 %v470, %v468
    %v579 = vpack.c.b16 %v471, %v469
    %v580 = vpack.c.b16 %v474, %v472
    %v581 = vpack.c.b16 %v475, %v473
    %v582 = vpack.c.b16 %v478, %v476
    %v583 = vpack.c.b16 %v479, %v477
    %v584 = vpack.c.b16 %v482, %v480
    %v585 = vpack.c.b16 %v483, %v481
    %v586 = vpack.c.b16 %v486, %v484
    %v587 = vpack.c.b16 %v487, %v485
    %v588 = vpack.c.b16 %v490, %v488
    %v589 = vpack.c.b16 %v491, %v489
    %v590 = vpack.c.b16 %v492, %v492
    %v591 = vpack.c.b16 %v493, %v493
    %vm688 = vcmask 39936
    %v690 = vsel %vm688, %v93, 0
    %vm692 = vcmask 1041408
    %vm693 = vcmask 1042432
    %v694 = vsel %vm692, 4294967295, 65535
    %v695 = vsel %vm693, %v694, 0
    %v697 = vand.u32 %v590, %v695
    %v700 = vand.u32 %v591, %v695
    %702 = vmatprep.subr.bf16.mxu0 %v509
    %703 = vmatpush1.bf16.msra.mxu0 %v508
    %704 = vmatprep.subr.bf16.mxu0 %v507
    %705 = vmatpush1.bf16.msra.mxu0 %v506
    %706 = vmatprep.subr.bf16.mxu0 %v505
    %707 = vmatpush1.bf16.msra.mxu0 %v504
    %708 = vmatprep.subr.bf16.mxu0 %v503
    %709 = vmatpush1.bf16.msra.mxu0 %v502
    %710 = vmatprep.subr.bf16.mxu0 %v501
    %711 = vmatpush1.bf16.msra.mxu0 %v500
    %712 = vmatprep.subr.bf16.mxu0 %v499
    %713 = vmatpush1.bf16.msra.mxu0 %v498
    %714 = vmatprep.subr.bf16.mxu0 %v497
    %715 = vmatpush1.bf16.msra.mxu0 %v496
    %716 = vmatprep.subr.bf16.mxu0 %v495
    %717 = vmatpush1.bf16.msra.mxu0 %v494
    %718 = vmatprep.subr.bf16.mxu0 %v525
    %719 = vmatpush2.bf16.msra.mxu0 %v524
    %720 = vmatprep.subr.bf16.mxu0 %v523
    %721 = vmatpush2.bf16.msra.mxu0 %v522
    %722 = vmatprep.subr.bf16.mxu0 %v521
    %723 = vmatpush2.bf16.msra.mxu0 %v520
    %724 = vmatprep.subr.bf16.mxu0 %v519
    %725 = vmatpush2.bf16.msra.mxu0 %v518
    %726 = vmatprep.subr.bf16.mxu0 %v517
    %727 = vmatpush2.bf16.msra.mxu0 %v516
    %728 = vmatprep.subr.bf16.mxu0 %v515
    %729 = vmatpush2.bf16.msra.mxu0 %v514
    %730 = vmatprep.subr.bf16.mxu0 %v513
    %731 = vmatpush2.bf16.msra.mxu0 %v512
    %732 = vmatprep.subr.bf16.mxu0 %v511
    %733 = vmatpush2.bf16.msra.mxu0 %v510
    %734 = vmatprep.mubr.bf16.mxu0 %v88
    %735 = vmatmul.mubr.bf16.gmra.mxu0 %v87
    %v736 = vpop.f32.mrf.mxu0
    %v737 = vadd.f32 %v196, %v736
    %v738 = vpop.f32.mrf.mxu0
    %v739 = vadd.f32 %v200, %v738
    %v740 = vpop.f32.mrf.mxu0
    %v741 = vpop.f32.mrf.mxu0
    %742 = vdwg.mxu0
    %743 = vmatprep.subr.bf16.mxu0 %v541
    %744 = vmatpush1.bf16.msra.mxu0 %v540
    %745 = vmatprep.subr.bf16.mxu0 %v539
    %746 = vmatpush1.bf16.msra.mxu0 %v538
    %747 = vmatprep.subr.bf16.mxu0 %v537
    %748 = vmatpush1.bf16.msra.mxu0 %v536
    %749 = vmatprep.subr.bf16.mxu0 %v535
    %750 = vmatpush1.bf16.msra.mxu0 %v534
    %751 = vmatprep.subr.bf16.mxu0 %v533
    %752 = vmatpush1.bf16.msra.mxu0 %v532
    %753 = vmatprep.subr.bf16.mxu0 %v531
    %754 = vmatpush1.bf16.msra.mxu0 %v530
    %755 = vmatprep.subr.bf16.mxu0 %v529
    %756 = vmatpush1.bf16.msra.mxu0 %v528
    %757 = vmatprep.subr.bf16.mxu0 %v527
    %758 = vmatpush1.bf16.msra.mxu0 %v526
    %759 = vmatprep.subr.bf16.mxu0 %v557
    %760 = vmatpush2.bf16.msra.mxu0 %v556
    %761 = vmatprep.subr.bf16.mxu0 %v555
    %762 = vmatpush2.bf16.msra.mxu0 %v554
    %763 = vmatprep.subr.bf16.mxu0 %v553
    %764 = vmatpush2.bf16.msra.mxu0 %v552
    %765 = vmatprep.subr.bf16.mxu0 %v551
    %766 = vmatpush2.bf16.msra.mxu0 %v550
    %767 = vmatprep.subr.bf16.mxu0 %v549
    %768 = vmatpush2.bf16.msra.mxu0 %v548
    %769 = vmatprep.subr.bf16.mxu0 %v547
    %770 = vmatpush2.bf16.msra.mxu0 %v546
    %771 = vmatprep.subr.bf16.mxu0 %v545
    %772 = vmatpush2.bf16.msra.mxu0 %v544
    %773 = vmatprep.subr.bf16.mxu0 %v543
    %774 = vmatpush2.bf16.msra.mxu0 %v542
    %775 = vmatprep.mubr.bf16.mxu0 %v90
    %776 = vmatmul.mubr.bf16.gmra.mxu0 %v89
    %v777 = vpop.f32.mrf.mxu0
    %v778 = vadd.f32 %v737, %v777
    %v779 = vpop.f32.mrf.mxu0
    %v780 = vadd.f32 %v739, %v779
    %v781 = vpop.f32.mrf.mxu0
    %v782 = vpop.f32.mrf.mxu0
    %783 = vdwg.mxu0
    %784 = vmatprep.subr.bf16.mxu0 %v573
    %785 = vmatpush1.bf16.msra.mxu0 %v572
    %786 = vmatprep.subr.bf16.mxu0 %v571
    %787 = vmatpush1.bf16.msra.mxu0 %v570
    %788 = vmatprep.subr.bf16.mxu0 %v569
    %789 = vmatpush1.bf16.msra.mxu0 %v568
    %790 = vmatprep.subr.bf16.mxu0 %v567
    %791 = vmatpush1.bf16.msra.mxu0 %v566
    %792 = vmatprep.subr.bf16.mxu0 %v565
    %793 = vmatpush1.bf16.msra.mxu0 %v564
    %794 = vmatprep.subr.bf16.mxu0 %v563
    %795 = vmatpush1.bf16.msra.mxu0 %v562
    %796 = vmatprep.subr.bf16.mxu0 %v561
    %797 = vmatpush1.bf16.msra.mxu0 %v560
    %798 = vmatprep.subr.bf16.mxu0 %v559
    %799 = vmatpush1.bf16.msra.mxu0 %v558
    %800 = vmatprep.subr.bf16.mxu0 %v589
    %801 = vmatpush2.bf16.msra.mxu0 %v588
    %802 = vmatprep.subr.bf16.mxu0 %v587
    %803 = vmatpush2.bf16.msra.mxu0 %v586
    %804 = vmatprep.subr.bf16.mxu0 %v585
    %805 = vmatpush2.bf16.msra.mxu0 %v584
    %806 = vmatprep.subr.bf16.mxu0 %v583
    %807 = vmatpush2.bf16.msra.mxu0 %v582
    %808 = vmatprep.subr.bf16.mxu0 %v581
    %809 = vmatpush2.bf16.msra.mxu0 %v580
    %810 = vmatprep.subr.bf16.mxu0 %v579
    %811 = vmatpush2.bf16.msra.mxu0 %v578
    %812 = vmatprep.subr.bf16.mxu0 %v577
    %813 = vmatpush2.bf16.msra.mxu0 %v576
    %814 = vmatprep.subr.bf16.mxu0 %v575
    %815 = vmatpush2.bf16.msra.mxu0 %v574
    %816 = vmatprep.mubr.bf16.mxu0 %v92
    %817 = vmatmul.mubr.bf16.gmra.mxu0 %v91
    %v818 = vpop.f32.mrf.mxu0
    %v819 = vadd.f32 %v778, %v818
    %v820 = vpop.f32.mrf.mxu0
    %v821 = vadd.f32 %v780, %v820
    %v822 = vpop.f32.mrf.mxu0
    %v823 = vpop.f32.mrf.mxu0
    %824 = vdwg.mxu0
    %825 = vmatprep.subr.bf16.mxu0 0
    %826 = vmatpush1.bf16.msra.mxu0 0
    %827 = vmatprep.subr.bf16.mxu0 0
    %828 = vmatpush1.bf16.msra.mxu0 0
    %829 = vmatprep.subr.bf16.mxu0 0
    %830 = vmatpush1.bf16.msra.mxu0 0
    %831 = vmatprep.subr.bf16.mxu0 0
    %832 = vmatpush1.bf16.msra.mxu0 0
    %833 = vmatprep.subr.bf16.mxu0 0
    %834 = vmatpush1.bf16.msra.mxu0 0
    %835 = vmatprep.subr.bf16.mxu0 0
    %836 = vmatpush1.bf16.msra.mxu0 0
    %837 = vmatprep.subr.bf16.mxu0 0
    %838 = vmatpush1.bf16.msra.mxu0 0
    %839 = vmatprep.subr.bf16.mxu0 %v700
    %840 = vmatpush1.bf16.msra.mxu0 %v697
    %841 = vmatprep.subr.bf16.mxu0 0
    %842 = vmatpush2.bf16.msra.mxu0 0
    %843 = vmatprep.subr.bf16.mxu0 0
    %844 = vmatpush2.bf16.msra.mxu0 0
    %845 = vmatprep.subr.bf16.mxu0 0
    %846 = vmatpush2.bf16.msra.mxu0 0
    %847 = vmatprep.subr.bf16.mxu0 0
    %848 = vmatpush2.bf16.msra.mxu0 0
    %849 = vmatprep.subr.bf16.mxu0 0
    %850 = vmatpush2.bf16.msra.mxu0 0
    %851 = vmatprep.subr.bf16.mxu0 0
    %852 = vmatpush2.bf16.msra.mxu0 0
    %853 = vmatprep.subr.bf16.mxu0 0
    %854 = vmatpush2.bf16.msra.mxu0 0
    %855 = vmatprep.subr.bf16.mxu0 0
    %856 = vmatpush2.bf16.msra.mxu0 0
    %857 = vmatprep.mubr.bf16.mxu0 0
    %858 = vmatmul.mubr.bf16.gmra.mxu0 %v690
    %v859 = vpop.f32.mrf.mxu0
    %v860 = vadd.f32 %v819, %v859
    %v861 = vpop.f32.mrf.mxu0
    %v862 = vadd.f32 %v821, %v861
    %v863 = vpop.f32.mrf.mxu0
    %v864 = vpop.f32.mrf.mxu0
    %865 = vdwg.mxu0
    %v866 = vmax.f32 %v860, 0.0
    %v867 = vmax.f32 %v862, 0.0
    %v868 = vpack.c.bf16 %v866, %v866
    %v869 = vpack.c.bf16 %v867, %v867
    %v870 = vld [vmem:[#allocation6] sm:$0xff]
    %v871 = vld [vmem:[#allocation6 + $0x8] sm:$0xff]
    %v872 = vld [vmem:[#allocation6 + $0x10] sm:$0xff]
    %v873 = vld [vmem:[#allocation6 + $0x18] sm:$0xff]
    %v874 = vld [vmem:[#allocation6 + $0x20] sm:$0xff]
    %v875 = vld [vmem:[#allocation6 + $0x28] sm:$0xff]
    %v876 = vld [vmem:[#allocation6 + $0x30] sm:$0xff]
    %v877 = vld [vmem:[#allocation6 + $0x38] sm:$0xff]
    %v878 = vld [vmem:[#allocation6 + $0x40] sm:$0xff]
    %v879 = vld [vmem:[#allocation6 + $0x48] sm:$0xff]
    %v880 = vld [vmem:[#allocation6 + $0x50] sm:$0xff]
    %v881 = vld [vmem:[#allocation6 + $0x58] sm:$0xff]
    %v882 = vld [vmem:[#allocation6 + $0x60] sm:$0xff]
    %v883 = vld [vmem:[#allocation6 + $0x68] sm:$0xff]
    %v884 = vld [vmem:[#allocation6 + $0x70] sm:$0xff]
    %v885 = vld [vmem:[#allocation6 + $0x78] sm:$0xff]
    %v886 = vld [vmem:[#allocation6 + $0x80] sm:$0xff]
    %v887 = vld [vmem:[#allocation6 + $0x88] sm:$0xff]
    %v888 = vld [vmem:[#allocation6 + $0x90] sm:$0xff]
    %v889 = vld [vmem:[#allocation6 + $0x98] sm:$0xff]
    %v890 = vld [vmem:[#allocation6 + $0xa0] sm:$0xff]
    %v891 = vld [vmem:[#allocation6 + $0xa8] sm:$0xff]
    %v892 = vld [vmem:[#allocation6 + $0xb0] sm:$0xff]
    %v893 = vld [vmem:[#allocation6 + $0xb8] sm:$0xff]
    %v894 = vld [vmem:[#allocation6 + $0xc0] sm:$0xff]
    %v895 = vld [vmem:[#allocation6 + $0xc8] sm:$0xff]
    %v896 = vld [vmem:[#allocation6 + $0xd0] sm:$0xff]
    %v897 = vld [vmem:[#allocation6 + $0xd8] sm:$0xff]
    %v898 = vld [vmem:[#allocation6 + $0xe0] sm:$0xff]
    %v899 = vld [vmem:[#allocation6 + $0xe8] sm:$0xff]
    %v900 = vld [vmem:[#allocation6 + $0xf0] sm:$0xff]
    %v901 = vld [vmem:[#allocation6 + $0xf8] sm:$0xff]
    %v902 = vld [vmem:[%s4] sm:$0x3]
    %v904 = vlaneseq
    %v905 = vshrl.u32 %v904, 7
    %v906 = vsub.s32 0, %v905
    %v907 = vrot.slane %v902, %v906
    %v908 = vlaneseq
    %v909 = vshrl.u32 %v908, 7
    %v910 = vsub.s32 1, %v909
    %v911 = vrot.slane %v902, %v910
    %v946 = vunpack.c.l.b16 %v870
    %v947 = vunpack.c.h.b16 %v870
    %v948 = vunpack.c.l.b16 %v871
    %v949 = vunpack.c.h.b16 %v871
    %v950 = vunpack.c.l.b16 %v872
    %v951 = vunpack.c.h.b16 %v872
    %v952 = vunpack.c.l.b16 %v873
    %v953 = vunpack.c.h.b16 %v873
    %v954 = vunpack.c.l.b16 %v874
    %v955 = vunpack.c.h.b16 %v874
    %v956 = vunpack.c.l.b16 %v875
    %v957 = vunpack.c.h.b16 %v875
    %v958 = vunpack.c.l.b16 %v876
    %v959 = vunpack.c.h.b16 %v876
    %v960 = vunpack.c.l.b16 %v877
    %v961 = vunpack.c.h.b16 %v877
    %v962 = vunpack.c.l.b16 %v878
    %v963 = vunpack.c.h.b16 %v878
    %v964 = vunpack.c.l.b16 %v879
    %v965 = vunpack.c.h.b16 %v879
    %v966 = vunpack.c.l.b16 %v880
    %v967 = vunpack.c.h.b16 %v880
    %v968 = vunpack.c.l.b16 %v881
    %v969 = vunpack.c.h.b16 %v881
    %v970 = vunpack.c.l.b16 %v882
    %v971 = vunpack.c.h.b16 %v882
    %v972 = vunpack.c.l.b16 %v883
    %v973 = vunpack.c.h.b16 %v883
    %v974 = vunpack.c.l.b16 %v884
    %v975 = vunpack.c.h.b16 %v884
    %v976 = vunpack.c.l.b16 %v885
    %v977 = vunpack.c.h.b16 %v885
    %v978 = vunpack.c.l.b16 %v886
    %v979 = vunpack.c.h.b16 %v886
    %v980 = vunpack.c.l.b16 %v887
    %v981 = vunpack.c.h.b16 %v887
    %v982 = vunpack.c.l.b16 %v888
    %v983 = vunpack.c.h.b16 %v888
    %v984 = vunpack.c.l.b16 %v889
    %v985 = vunpack.c.h.b16 %v889
    %v986 = vunpack.c.l.b16 %v890
    %v987 = vunpack.c.h.b16 %v890
    %v988 = vunpack.c.l.b16 %v891
    %v989 = vunpack.c.h.b16 %v891
    %v990 = vunpack.c.l.b16 %v892
    %v991 = vunpack.c.h.b16 %v892
    %v992 = vunpack.c.l.b16 %v893
    %v993 = vunpack.c.h.b16 %v893
    %v994 = vunpack.c.l.b16 %v894
    %v995 = vunpack.c.h.b16 %v894
    %v996 = vunpack.c.l.b16 %v895
    %v997 = vunpack.c.h.b16 %v895
    %v998 = vunpack.c.l.b16 %v896
    %v999 = vunpack.c.h.b16 %v896
    %v1000 = vunpack.c.l.b16 %v897
    %v1001 = vunpack.c.h.b16 %v897
    %v1002 = vunpack.c.l.b16 %v898
    %v1003 = vunpack.c.h.b16 %v898
    %v1004 = vunpack.c.l.b16 %v899
    %v1005 = vunpack.c.h.b16 %v899
    %v1006 = vunpack.c.l.b16 %v900
    %v1007 = vunpack.c.h.b16 %v900
    %v1008 = vunpack.c.l.b16 %v901
    %v1009 = vunpack.c.h.b16 %v901
    %v1010 = vpack.c.b16 %v948, %v946
    %v1011 = vpack.c.b16 %v949, %v947
    %v1012 = vpack.c.b16 %v952, %v950
    %v1013 = vpack.c.b16 %v953, %v951
    %v1014 = vpack.c.b16 %v956, %v954
    %v1015 = vpack.c.b16 %v957, %v955
    %v1016 = vpack.c.b16 %v960, %v958
    %v1017 = vpack.c.b16 %v961, %v959
    %v1018 = vpack.c.b16 %v964, %v962
    %v1019 = vpack.c.b16 %v965, %v963
    %v1020 = vpack.c.b16 %v968, %v966
    %v1021 = vpack.c.b16 %v969, %v967
    %v1022 = vpack.c.b16 %v972, %v970
    %v1023 = vpack.c.b16 %v973, %v971
    %v1024 = vpack.c.b16 %v976, %v974
    %v1025 = vpack.c.b16 %v977, %v975
    %v1026 = vpack.c.b16 %v980, %v978
    %v1027 = vpack.c.b16 %v981, %v979
    %v1028 = vpack.c.b16 %v984, %v982
    %v1029 = vpack.c.b16 %v985, %v983
    %v1030 = vpack.c.b16 %v988, %v986
    %v1031 = vpack.c.b16 %v989, %v987
    %v1032 = vpack.c.b16 %v992, %v990
    %v1033 = vpack.c.b16 %v993, %v991
    %v1034 = vpack.c.b16 %v996, %v994
    %v1035 = vpack.c.b16 %v997, %v995
    %v1036 = vpack.c.b16 %v1000, %v998
    %v1037 = vpack.c.b16 %v1001, %v999
    %v1038 = vpack.c.b16 %v1004, %v1002
    %v1039 = vpack.c.b16 %v1005, %v1003
    %v1040 = vpack.c.b16 %v1008, %v1006
    %v1041 = vpack.c.b16 %v1009, %v1007
    %1074 = vmatprep.subr.bf16.mxu0 %v1025
    %1075 = vmatpush1.bf16.msra.mxu0 %v1024
    %1076 = vmatprep.subr.bf16.mxu0 %v1023
    %1077 = vmatpush1.bf16.msra.mxu0 %v1022
    %1078 = vmatprep.subr.bf16.mxu0 %v1021
    %1079 = vmatpush1.bf16.msra.mxu0 %v1020
    %1080 = vmatprep.subr.bf16.mxu0 %v1019
    %1081 = vmatpush1.bf16.msra.mxu0 %v1018
    %1082 = vmatprep.subr.bf16.mxu0 %v1017
    %1083 = vmatpush1.bf16.msra.mxu0 %v1016
    %1084 = vmatprep.subr.bf16.mxu0 %v1015
    %1085 = vmatpush1.bf16.msra.mxu0 %v1014
    %1086 = vmatprep.subr.bf16.mxu0 %v1013
    %1087 = vmatpush1.bf16.msra.mxu0 %v1012
    %1088 = vmatprep.subr.bf16.mxu0 %v1011
    %1089 = vmatpush1.bf16.msra.mxu0 %v1010
    %1090 = vmatprep.subr.bf16.mxu0 %v1041
    %1091 = vmatpush2.bf16.msra.mxu0 %v1040
    %1092 = vmatprep.subr.bf16.mxu0 %v1039
    %1093 = vmatpush2.bf16.msra.mxu0 %v1038
    %1094 = vmatprep.subr.bf16.mxu0 %v1037
    %1095 = vmatpush2.bf16.msra.mxu0 %v1036
    %1096 = vmatprep.subr.bf16.mxu0 %v1035
    %1097 = vmatpush2.bf16.msra.mxu0 %v1034
    %1098 = vmatprep.subr.bf16.mxu0 %v1033
    %1099 = vmatpush2.bf16.msra.mxu0 %v1032
    %1100 = vmatprep.subr.bf16.mxu0 %v1031
    %1101 = vmatpush2.bf16.msra.mxu0 %v1030
    %1102 = vmatprep.subr.bf16.mxu0 %v1029
    %1103 = vmatpush2.bf16.msra.mxu0 %v1028
    %1104 = vmatprep.subr.bf16.mxu0 %v1027
    %1105 = vmatpush2.bf16.msra.mxu0 %v1026
    %1106 = vmatprep.mubr.bf16.mxu0 %v869
    %1107 = vmatmul.mubr.bf16.gmra.mxu0 %v868
    %v1108 = vpop.f32.mrf.mxu0
    %v1109 = vadd.f32 %v907, %v1108
    %v1110 = vpop.f32.mrf.mxu0
    %v1111 = vadd.f32 %v911, %v1110
    %v1112 = vpop.f32.mrf.mxu0
    %v1113 = vpop.f32.mrf.mxu0
    %1114 = vdwg.mxu0
    %v1115 = vmax.f32 %v1109, 0.0
    %v1116 = vmax.f32 %v1111, 0.0
    %v1117 = vpack.c.bf16 %v1115, %v1115
    %v1118 = vpack.c.bf16 %v1116, %v1116
    %v1119 = vld [vmem:[#allocation7] sm:$0xf]
    %v1120 = vld [vmem:[#allocation7 + $0x4] sm:$0xf]
    %v1121 = vld [vmem:[#allocation7 + $0x8] sm:$0xf]
    %v1122 = vld [vmem:[#allocation7 + $0xc] sm:$0xf]
    %v1123 = vld [vmem:[#allocation7 + $0x10] sm:$0xf]
    %v1124 = vld [vmem:[#allocation7 + $0x14] sm:$0xf]
    %v1125 = vld [vmem:[#allocation7 + $0x18] sm:$0xf]
    %v1126 = vld [vmem:[#allocation7 + $0x1c] sm:$0xf]
    %v1127 = vld [vmem:[#allocation7 + $0x20] sm:$0xf]
    %v1128 = vld [vmem:[#allocation7 + $0x24] sm:$0xf]
    %v1129 = vld [vmem:[#allocation7 + $0x28] sm:$0xf]
    %v1130 = vld [vmem:[#allocation7 + $0x2c] sm:$0xf]
    %v1131 = vld [vmem:[#allocation7 + $0x30] sm:$0xf]
    %v1132 = vld [vmem:[#allocation7 + $0x34] sm:$0xf]
    %v1133 = vld [vmem:[#allocation7 + $0x38] sm:$0xf]
    %v1134 = vld [vmem:[#allocation7 + $0x3c] sm:$0xf]
    %v1135 = vld [vmem:[#allocation7 + $0x40] sm:$0xf]
    %v1136 = vld [vmem:[#allocation7 + $0x44] sm:$0xf]
    %v1137 = vld [vmem:[#allocation7 + $0x48] sm:$0xf]
    %v1138 = vld [vmem:[#allocation7 + $0x4c] sm:$0xf]
    %v1139 = vld [vmem:[#allocation7 + $0x50] sm:$0xf]
    %v1140 = vld [vmem:[#allocation7 + $0x54] sm:$0xf]
    %v1141 = vld [vmem:[#allocation7 + $0x58] sm:$0xf]
    %v1142 = vld [vmem:[#allocation7 + $0x5c] sm:$0xf]
    %v1143 = vld [vmem:[#allocation7 + $0x60] sm:$0xf]
    %v1144 = vld [vmem:[#allocation7 + $0x64] sm:$0xf]
    %v1145 = vld [vmem:[#allocation7 + $0x68] sm:$0xf]
    %v1146 = vld [vmem:[#allocation7 + $0x6c] sm:$0xf]
    %v1147 = vld [vmem:[#allocation7 + $0x70] sm:$0xf]
    %v1148 = vld [vmem:[#allocation7 + $0x74] sm:$0xf]
    %v1149 = vld [vmem:[#allocation7 + $0x78] sm:$0xf]
    %v1150 = vld [vmem:[#allocation7 + $0x7c] sm:$0xf]
    %v1151 = vld [vmem:[%s6] sm:$0x1]
    %v1153 = vlaneseq
    %v1154 = vshrl.u32 %v1153, 7
    %v1155 = vsub.s32 0, %v1154
    %v1156 = vrot.slane %v1151, %v1155
    %v1190 = vunpack.c.l.b16 %v1119
    %v1191 = vunpack.c.l.b16 %v1120
    %v1192 = vunpack.c.l.b16 %v1121
    %v1193 = vunpack.c.l.b16 %v1122
    %v1194 = vunpack.c.l.b16 %v1123
    %v1195 = vunpack.c.l.b16 %v1124
    %v1196 = vunpack.c.l.b16 %v1125
    %v1197 = vunpack.c.l.b16 %v1126
    %v1198 = vunpack.c.l.b16 %v1127
    %v1199 = vunpack.c.l.b16 %v1128
    %v1200 = vunpack.c.l.b16 %v1129
    %v1201 = vunpack.c.l.b16 %v1130
    %v1202 = vunpack.c.l.b16 %v1131
    %v1203 = vunpack.c.l.b16 %v1132
    %v1204 = vunpack.c.l.b16 %v1133
    %v1205 = vunpack.c.l.b16 %v1134
    %v1206 = vunpack.c.l.b16 %v1135
    %v1207 = vunpack.c.l.b16 %v1136
    %v1208 = vunpack.c.l.b16 %v1137
    %v1209 = vunpack.c.l.b16 %v1138
    %v1210 = vunpack.c.l.b16 %v1139
    %v1211 = vunpack.c.l.b16 %v1140
    %v1212 = vunpack.c.l.b16 %v1141
    %v1213 = vunpack.c.l.b16 %v1142
    %v1214 = vunpack.c.l.b16 %v1143
    %v1215 = vunpack.c.l.b16 %v1144
    %v1216 = vunpack.c.l.b16 %v1145
    %v1217 = vunpack.c.l.b16 %v1146
    %v1218 = vunpack.c.l.b16 %v1147
    %v1219 = vunpack.c.l.b16 %v1148
    %v1220 = vunpack.c.l.b16 %v1149
    %v1221 = vunpack.c.l.b16 %v1150
    %v1222 = vpack.c.b16 %v1191, %v1190
    %v1223 = vpack.c.b16 %v1193, %v1192
    %v1224 = vpack.c.b16 %v1195, %v1194
    %v1225 = vpack.c.b16 %v1197, %v1196
    %v1226 = vpack.c.b16 %v1199, %v1198
    %v1227 = vpack.c.b16 %v1201, %v1200
    %v1228 = vpack.c.b16 %v1203, %v1202
    %v1229 = vpack.c.b16 %v1205, %v1204
    %v1230 = vpack.c.b16 %v1207, %v1206
    %v1231 = vpack.c.b16 %v1209, %v1208
    %v1232 = vpack.c.b16 %v1211, %v1210
    %v1233 = vpack.c.b16 %v1213, %v1212
    %v1234 = vpack.c.b16 %v1215, %v1214
    %v1235 = vpack.c.b16 %v1217, %v1216
    %v1236 = vpack.c.b16 %v1219, %v1218
    %v1237 = vpack.c.b16 %v1221, %v1220
    %1254 = vmatprep.subr.bf16.mxu0 0
    %1255 = vmatpush1.bf16.msra.mxu0 %v1229
    %1256 = vmatprep.subr.bf16.mxu0 0
    %1257 = vmatpush1.bf16.msra.mxu0 %v1228
    %1258 = vmatprep.subr.bf16.mxu0 0
    %1259 = vmatpush1.bf16.msra.mxu0 %v1227
    %1260 = vmatprep.subr.bf16.mxu0 0
    %1261 = vmatpush1.bf16.msra.mxu0 %v1226
    %1262 = vmatprep.subr.bf16.mxu0 0
    %1263 = vmatpush1.bf16.msra.mxu0 %v1225
    %1264 = vmatprep.subr.bf16.mxu0 0
    %1265 = vmatpush1.bf16.msra.mxu0 %v1224
    %1266 = vmatprep.subr.bf16.mxu0 0
    %1267 = vmatpush1.bf16.msra.mxu0 %v1223
    %1268 = vmatprep.subr.bf16.mxu0 0
    %1269 = vmatpush1.bf16.msra.mxu0 %v1222
    %1270 = vmatprep.subr.bf16.mxu0 0
    %1271 = vmatpush2.bf16.msra.mxu0 %v1237
    %1272 = vmatprep.subr.bf16.mxu0 0
    %1273 = vmatpush2.bf16.msra.mxu0 %v1236
    %1274 = vmatprep.subr.bf16.mxu0 0
    %1275 = vmatpush2.bf16.msra.mxu0 %v1235
    %1276 = vmatprep.subr.bf16.mxu0 0
    %1277 = vmatpush2.bf16.msra.mxu0 %v1234
    %1278 = vmatprep.subr.bf16.mxu0 0
    %1279 = vmatpush2.bf16.msra.mxu0 %v1233
    %1280 = vmatprep.subr.bf16.mxu0 0
    %1281 = vmatpush2.bf16.msra.mxu0 %v1232
    %1282 = vmatprep.subr.bf16.mxu0 0
    %1283 = vmatpush2.bf16.msra.mxu0 %v1231
    %1284 = vmatprep.subr.bf16.mxu0 0
    %1285 = vmatpush2.bf16.msra.mxu0 %v1230
    %1286 = vmatprep.mubr.bf16.mxu0 %v1118
    %1287 = vmatmul.mubr.bf16.gmra.mxu0 %v1117
    %v1288 = vpop.f32.mrf.mxu0
    %v1289 = vadd.f32 %v1156, %v1288
    %v1290 = vpop.f32.mrf.mxu0
    %v1291 = vpop.f32.mrf.mxu0
    %v1292 = vpop.f32.mrf.mxu0
    %1293 = vdwg.mxu0
    %v1294 = vtanh.pop %v1289
    %vm1295 = vcmask 7168
    %1296 = vst.msk [vmem:[%s7] sm:$0xff] %vm1295, %v1294
    // Predicated region
    $region46: #{tpu_custom_call.1} parent=1 // pred_check
      _
    $region47: #{tpu_custom_call.1} parent=1 // pred_check_branch
      %1298 = sbr.rel (0) target = $region49
    $region48: #{tpu_custom_call.1} parent=1 // pred_region
      _
    $region49: #{tpu_custom_call.1} parent=1 // pred_fallthru
      _
    // Predicated region
    $region50: #{tpu_custom_call.1} parent=1 // pred_check
      _
    $region51: #{tpu_custom_call.1} parent=1 // pred_check_branch
      %1300 = sbr.rel (0) target = $region53
    $region52: #{tpu_custom_call.1} parent=1 // pred_region
      _
    $region53: #{tpu_custom_call.1} parent=1 // pred_fallthru
      _
    %1301 = vsyncpa [#allocation3], 1
    %1302 = vsyncpa [#allocation5], 1
    %1303 = vsyncpa [#allocation8], 1

</llo_original>
